<compile_context>
chip_gen: v5e
topology: v5e:2x2
jax: 0.10.0
libtpu: 0.0.40
codegen_flags: <defaults>
</compile_context>

<pallas_src>
import jax
import jax.numpy as jnp
from jax.experimental import pallas as pl
from jax.experimental.pallas import tpu as pltpu


def _round_up(n: int, m: int) -> int:
    return ((n + m - 1) // m) * m


def mlp_distill_kernel(x_ref, w1_ref, b1_ref, w2_ref, b2_ref, o_ref):
    # Cast activations to the weight dtype only at the MXU boundary; bias add
    # and ReLU stay on the f32 accumulator (VPU-friendly, incl. v5e which has
    # no bf16 VALU).
    x = x_ref[...].astype(w1_ref.dtype)
    h = jnp.dot(x, w1_ref[...], preferred_element_type=jnp.float32)
    h = jnp.maximum(h + b1_ref[...], 0.0)
    y = jnp.dot(h.astype(w2_ref.dtype), w2_ref[...],
                preferred_element_type=jnp.float32)
    o_ref[...] = (y + b2_ref[...]).astype(o_ref.dtype)


def mlp_distill_forward(x, w1, b1, w2, b2, *, block_rows=512):
    """x: [B, input_dim] (f32); w1: [input_dim, hidden]; b1: [hidden];
       w2: [hidden, output]; b2: [output]  ->  [B, output] (f32).

    Weights may be bf16 (pre-cast once at init) or f32; the kernel casts the
    activations to the weight dtype internally and accumulates in f32.
    """
    B, input_dim = x.shape
    hidden_dim = w1.shape[1]
    output_dim = w2.shape[1]

    # Biases as (1, N) f32 rows (broadcast over the row tile inside the kernel).
    if b1.ndim == 1:
        b1 = b1.reshape(1, hidden_dim)
    if b2.ndim == 1:
        b2 = b2.reshape(1, output_dim)
    b1 = b1.astype(jnp.float32)
    b2 = b2.astype(jnp.float32)

    # Row tile: a multiple of 8 sublanes, never larger than the (8-rounded)
    # batch, so small B is a single grid step. The last tile may be partial;
    # Pallas masks the out-of-bounds rows (no pad / slice needed).
    tm = min(_round_up(block_rows, 8), _round_up(B, 8))
    grid = (pl.cdiv(B, tm),)

    w_itemsize = jnp.dtype(w1.dtype).itemsize
    flops = 2 * B * (input_dim * hidden_dim + hidden_dim * output_dim)
    bytes_accessed = (
        B * input_dim * jnp.dtype(x.dtype).itemsize        # x
        + input_dim * hidden_dim * w_itemsize               # w1
        + hidden_dim * output_dim * w_itemsize               # w2
        + (hidden_dim + output_dim) * 4                       # biases (f32)
        + B * output_dim * 4                                  # output (f32)
    )

    return pl.pallas_call(
        mlp_distill_kernel,
        out_shape=jax.ShapeDtypeStruct((B, output_dim), jnp.float32),
        grid_spec=pltpu.PrefetchScalarGridSpec(
            num_scalar_prefetch=0,
            grid=grid,
            in_specs=[
                # x: tiled over batch rows (double-buffered by the pipeline).
                pl.BlockSpec((tm, input_dim), lambda i: (i, 0)),
                # Weights / biases: constant index_map -> VMEM-resident.
                pl.BlockSpec((input_dim, hidden_dim), lambda i: (0, 0)),
                pl.BlockSpec((1, hidden_dim), lambda i: (0, 0)),
                pl.BlockSpec((hidden_dim, output_dim), lambda i: (0, 0)),
                pl.BlockSpec((1, output_dim), lambda i: (0, 0)),
            ],
            out_specs=pl.BlockSpec((tm, output_dim), lambda i: (i, 0)),
        ),
        compiler_params=pltpu.CompilerParams(
            dimension_semantics=("parallel",)),
        cost_estimate=pl.CostEstimate(
            flops=flops, transcendentals=0, bytes_accessed=bytes_accessed),
    )(x, w1, b1, w2, b2)


if __name__ == "__main__":
    # Small shapes consistent with the module's forward.
    B, input_dim, hidden_dim, output_dim = 72, 32, 64, 16

    key = jax.random.PRNGKey(0)
    kx, kw1, kb1, kw2, kb2 = jax.random.split(key, 5)

    x = jax.random.normal(kx, (B, input_dim), dtype=jnp.float32)
    # PyTorch Linear stores weight as [out, in]; we keep the transposed
    # [in, out] layout so the kernel computes plain x @ W + b.
    w1 = jax.random.normal(kw1, (input_dim, hidden_dim), dtype=jnp.float32) * 0.1
    b1 = jax.random.normal(kb1, (hidden_dim,), dtype=jnp.float32) * 0.1
    w2 = jax.random.normal(kw2, (hidden_dim, output_dim), dtype=jnp.float32) * 0.1
    b2 = jax.random.normal(kb2, (output_dim,), dtype=jnp.float32) * 0.1

    # "Init-time" parameter prep (done ONCE, not per forward): bf16 weights.
    w1_bf16 = w1.astype(jnp.bfloat16)
    w2_bf16 = w2.astype(jnp.bfloat16)

    # --- bf16-MXU path (recommended config; default block_rows -> grid=(1,)).
    out = mlp_distill_forward(x, w1_bf16, b1, w2_bf16, b2)
    out = jax.block_until_ready(out)
    assert out.shape == (B, output_dim)
    assert out.dtype == jnp.float32

    # Reference applying the SAME roundings as the kernel:
    # x -> bf16 before fc1, hidden -> bf16 before fc2, f32 accumulation.
    xr = x.astype(jnp.bfloat16).astype(jnp.float32)
    w1r = w1_bf16.astype(jnp.float32)
    w2r = w2_bf16.astype(jnp.float32)
    h_ref = jnp.maximum(xr @ w1r + b1, 0.0)
    ref_bf16 = h_ref.astype(jnp.bfloat16).astype(jnp.float32) @ w2r + b2
    assert jnp.allclose(out, ref_bf16, atol=2e-2, rtol=2e-2), (
        "bf16 path mismatch, max abs diff = "
        f"{float(jnp.max(jnp.abs(out - ref_bf16)))}")

    # --- f32 path (in-kernel casts become no-ops) vs. high-precision reference.
    out_f32 = jax.block_until_ready(mlp_distill_forward(x, w1, b1, w2, b2))
    hp = jax.lax.Precision.HIGHEST
    ref_f32 = (jnp.matmul(jnp.maximum(jnp.matmul(x, w1, precision=hp) + b1, 0.0),
                          w2, precision=hp) + b2)
    # Tolerance is loose to stay robust across MXU f32-emulation modes; real
    # bugs (missing bias/ReLU, transposed weights) are orders of magnitude off.
    assert jnp.allclose(out_f32, ref_f32, atol=1e-2, rtol=1e-2), (
        "f32 path mismatch, max abs diff = "
        f"{float(jnp.max(jnp.abs(out_f32 - ref_f32)))}")

    print("KERNEL_OK")
</pallas_src>

<mosaic_0001>
module attributes {stable_mosaic.version = 11 : i64} {
  func.func @mlp_distill_kernel(%arg0: i32, %arg1: memref<72x32xf32, #tpu.memory_space<vmem>>, %arg2: memref<32x64xbf16, #tpu.memory_space<vmem>>, %arg3: memref<1x64xf32, #tpu.memory_space<vmem>>, %arg4: memref<64x16xbf16, #tpu.memory_space<vmem>>, %arg5: memref<1x16xf32, #tpu.memory_space<vmem>>, %arg6: memref<72x16xf32, #tpu.memory_space<vmem>>) attributes {dimension_semantics = [#tpu.dimension_semantics<parallel>], iteration_bounds = array<i64: 1>, scalar_prefetch = 0 : i64, scratch_operands = 0 : i64, tpu.core_type = #tpu.core_type<tc>, window_params = [{transform_indices = @transform_0, window_bounds = array<i64: 72, 32>}, {pipeline_mode = #tpu.pipeline_mode<synchronous>, transform_indices = @transform_1, window_bounds = array<i64: 32, 64>}, {pipeline_mode = #tpu.pipeline_mode<synchronous>, transform_indices = @transform_2, window_bounds = array<i64: 1, 64>}, {pipeline_mode = #tpu.pipeline_mode<synchronous>, transform_indices = @transform_3, window_bounds = array<i64: 64, 16>}, {pipeline_mode = #tpu.pipeline_mode<synchronous>, transform_indices = @transform_4, window_bounds = array<i64: 1, 16>}, {transform_indices = @transform_5, window_bounds = array<i64: 72, 16>}]} {
    %c0 = arith.constant 0 : index
    %c0_0 = arith.constant 0 : index
    %0 = vector.load %arg1[%c0, %c0_0] : memref<72x32xf32, #tpu.memory_space<vmem>>, vector<72x32xf32>
    %1 = arith.truncf %0 : vector<72x32xf32> to vector<72x32xbf16>
    %c0_1 = arith.constant 0 : index
    %c0_2 = arith.constant 0 : index
    %2 = vector.load %arg2[%c0_1, %c0_2] : memref<32x64xbf16, #tpu.memory_space<vmem>>, vector<32x64xbf16>
    %cst = arith.constant dense<0.000000e+00> : vector<72x64xf32>
    %3 = tpu.matmul %1, %2, %cst {dimension_numbers = #tpu.dot_dimension_numbers<[1], [0], [0], [1], [0, 0, 1, 1], [], []>} : vector<72x32xbf16>, vector<32x64xbf16>, vector<72x64xf32> -> vector<72x64xf32>
    %c0_3 = arith.constant 0 : index
    %c0_4 = arith.constant 0 : index
    %4 = vector.load %arg3[%c0_3, %c0_4] : memref<1x64xf32, #tpu.memory_space<vmem>>, vector<1x64xf32>
    %5 = vector.broadcast %4 : vector<1x64xf32> to vector<72x64xf32>
    %6 = arith.addf %3, %5 : vector<72x64xf32>
    %cst_5 = arith.constant 0.000000e+00 : f32
    %7 = vector.broadcast %cst_5 : f32 to vector<72x64xf32>
    %8 = arith.maximumf %6, %7 : vector<72x64xf32>
    %9 = arith.truncf %8 : vector<72x64xf32> to vector<72x64xbf16>
    %c0_6 = arith.constant 0 : index
    %c0_7 = arith.constant 0 : index
    %10 = vector.load %arg4[%c0_6, %c0_7] : memref<64x16xbf16, #tpu.memory_space<vmem>>, vector<64x16xbf16>
    %cst_8 = arith.constant dense<0.000000e+00> : vector<72x16xf32>
    %11 = tpu.matmul %9, %10, %cst_8 {dimension_numbers = #tpu.dot_dimension_numbers<[1], [0], [0], [1], [0, 0, 1, 1], [], []>} : vector<72x64xbf16>, vector<64x16xbf16>, vector<72x16xf32> -> vector<72x16xf32>
    %c0_9 = arith.constant 0 : index
    %c0_10 = arith.constant 0 : index
    %12 = vector.load %arg5[%c0_9, %c0_10] : memref<1x16xf32, #tpu.memory_space<vmem>>, vector<1x16xf32>
    %13 = vector.broadcast %12 : vector<1x16xf32> to vector<72x16xf32>
    %14 = arith.addf %11, %13 : vector<72x16xf32>
    %c0_11 = arith.constant 0 : index
    %c0_12 = arith.constant 0 : index
    %15 = vector.load %arg6[%c0_11, %c0_12] : memref<72x16xf32, #tpu.memory_space<vmem>>, vector<72x16xf32>
    tpu.vector_store %arg6[%c0_11, %c0_12], %14 {strides = array<i32>} : memref<72x16xf32, #tpu.memory_space<vmem>>, vector<72x16xf32>,
    return
  }
  func.func @transform_0(%arg0: i32) -> (i32, i32) {
    %c0_i32 = arith.constant 0 : i32
    %c0_i32_0 = arith.constant 0 : i32
    return %arg0, %c0_i32 : i32, i32
  }
  func.func @transform_1(%arg0: i32) -> (i32, i32) {
    %c0_i32 = arith.constant 0 : i32
    %c0_i32_0 = arith.constant 0 : i32
    %c0_i32_1 = arith.constant 0 : i32
    return %c0_i32, %c0_i32_0 : i32, i32
  }
  func.func @transform_2(%arg0: i32) -> (i32, i32) {
    %c0_i32 = arith.constant 0 : i32
    %c0_i32_0 = arith.constant 0 : i32
    %c0_i32_1 = arith.constant 0 : i32
    return %c0_i32, %c0_i32_0 : i32, i32
  }
  func.func @transform_3(%arg0: i32) -> (i32, i32) {
    %c0_i32 = arith.constant 0 : i32
    %c0_i32_0 = arith.constant 0 : i32
    %c0_i32_1 = arith.constant 0 : i32
    return %c0_i32, %c0_i32_0 : i32, i32
  }
  func.func @transform_4(%arg0: i32) -> (i32, i32) {
    %c0_i32 = arith.constant 0 : i32
    %c0_i32_0 = arith.constant 0 : i32
    %c0_i32_1 = arith.constant 0 : i32
    return %c0_i32, %c0_i32_0 : i32, i32
  }
  func.func @transform_5(%arg0: i32) -> (i32, i32) {
    %c0_i32 = arith.constant 0 : i32
    %c0_i32_0 = arith.constant 0 : i32
    return %arg0, %c0_i32 : i32, i32
  }
}

</mosaic_0001>

<llo_original>
// kernel: tpu_custom_call.1
$region0: #{tpu_custom_call.1}
  #allocation0 [shape = 'u32[]', space=smem, size = 0x4, offset = 0x4, fixed_abs, tag = 'smem constant byte address 0x4 - core index']
  #allocation1 [shape = 'u32[72,128]{1,0:T(1,128)}', space=vmem, size = 0x9000, scoped, tag = 'internal scratch']
  %s0 = inlined_call_operand.vmem [shape: f32[72,32], index: 0, kind: input, shape index: {}]
  %s1 = inlined_call_operand.vmem [shape: bf16[32,64], index: 1, kind: input, shape index: {}]
  %s2 = inlined_call_operand.vmem [shape: f32[1,64], index: 2, kind: input, shape index: {}]
  %s3 = inlined_call_operand.vmem [shape: bf16[64,16], index: 3, kind: input, shape index: {}]
  %s4 = inlined_call_operand.vmem [shape: f32[1,16], index: 4, kind: input, shape index: {}]
  %s5 = inlined_call_operand.vmem [shape: f32[72,16], index: 5, kind: output, shape index: {}]
  %s6 = sld [smem:[#allocation0]]
  $region30: #{tpu_custom_call.1} parent=0
    _
  %s8 = ssub.s32 1, %s6
  %s9 = scalar_select 0, %s8, %s6
  // Predicated region
  $region2: #{tpu_custom_call.1} parent=0 // pred_check
    _
  $region3: #{tpu_custom_call.1} parent=0 // pred_check_branch
    %11 = sbr.rel (0) target = $region5
  $region4: #{tpu_custom_call.1} parent=0 // pred_region
    _
  $region5: #{tpu_custom_call.1} parent=0 // pred_fallthru
    _
  // Predicated region
  $region6: #{tpu_custom_call.1} parent=0 // pred_check
    _
  $region7: #{tpu_custom_call.1} parent=0 // pred_check_branch
    %13 = sbr.rel (0) target = $region9
  $region8: #{tpu_custom_call.1} parent=0 // pred_region
    _
  $region9: #{tpu_custom_call.1} parent=0 // pred_fallthru
    _
  // Predicated region
  $region10: #{tpu_custom_call.1} parent=0 // pred_check
    _
  $region11: #{tpu_custom_call.1} parent=0 // pred_check_branch
    %15 = sbr.rel (0) target = $region13
  $region12: #{tpu_custom_call.1} parent=0 // pred_region
    _
  $region13: #{tpu_custom_call.1} parent=0 // pred_fallthru
    _
  // Predicated region
  $region14: #{tpu_custom_call.1} parent=0 // pred_check
    _
  $region15: #{tpu_custom_call.1} parent=0 // pred_check_branch
    %17 = sbr.rel (0) target = $region17
  $region16: #{tpu_custom_call.1} parent=0 // pred_region
    _
  $region17: #{tpu_custom_call.1} parent=0 // pred_fallthru
    _
  // Predicated region
  $region18: #{tpu_custom_call.1} parent=0 // pred_check
    _
  $region19: #{tpu_custom_call.1} parent=0 // pred_check_branch
    %19 = sbr.rel (0) target = $region21
  $region20: #{tpu_custom_call.1} parent=0 // pred_region
    _
  $region21: #{tpu_custom_call.1} parent=0 // pred_fallthru
    _
  %v21 = vld [vmem:[%s0] sm:$0xff]
  %v22 = vld [vmem:[%s0 + $0x8] sm:$0xff]
  %v23 = vld [vmem:[%s0 + $0x10] sm:$0xff]
  %v24 = vld [vmem:[%s0 + $0x18] sm:$0xff]
  %v25 = vld [vmem:[%s0 + $0x20] sm:$0xff]
  %v26 = vld [vmem:[%s0 + $0x28] sm:$0xff]
  %v27 = vld [vmem:[%s0 + $0x30] sm:$0xff]
  %v28 = vld [vmem:[%s0 + $0x38] sm:$0xff]
  %v29 = vld [vmem:[%s0 + $0x40] sm:$0xff]
  %v30 = vpack.c.bf16 %v22, %v21
  %v31 = vpack.c.bf16 %v24, %v23
  %v32 = vpack.c.bf16 %v26, %v25
  %v33 = vpack.c.bf16 %v28, %v27
  %v34 = vpack.c.bf16 %v29, %v29
  %v35 = vld [vmem:[%s1] sm:$0xf]
  %v36 = vld [vmem:[%s1 + $0x4] sm:$0xf]
  %v37 = vld [vmem:[%s1 + $0x8] sm:$0xf]
  %v38 = vld [vmem:[%s1 + $0xc] sm:$0xf]
  %v39 = vld [vmem:[%s2] sm:$0x1]
  %v41 = vperm.slane %v39, 0
  %v47 = vunpack.c.l.b16 %v35
  %v48 = vunpack.c.l.b16 %v36
  %v49 = vunpack.c.l.b16 %v37
  %v50 = vunpack.c.l.b16 %v38
  %v51 = vpack.c.b16 %v48, %v47
  %v52 = vpack.c.b16 %v50, %v49
  %vm55 = vcmask 261120
  %v57 = vsel %vm55, %v30, 0
  %v60 = vsel %vm55, %v31, 0
  %v63 = vsel %vm55, %v32, 0
  %v66 = vsel %vm55, %v33, 0
  %v69 = vsel %vm55, %v34, 0
  %71 = vmatpush.bf16.msra.mxu0 0
  %72 = vmatpush.bf16.msra.mxu0 0
  %73 = vmatpush.bf16.msra.mxu0 0
  %74 = vmatpush.bf16.msra.mxu0 0
  %75 = vmatpush.bf16.msra.mxu0 0
  %76 = vmatpush.bf16.msra.mxu0 0
  %77 = vmatpush.bf16.msra.mxu0 %v52
  %78 = vmatpush.bf16.msra.mxu0 %v51
  %79 = vmatmul.bf16.gmra.mxu0 %v57
  %v80 = vpop.f32.mrf.mxu0
  %v81 = vadd.f32 %v41, %v80
  %v82 = vpop.f32.mrf.mxu0
  %v83 = vadd.f32 %v41, %v82
  %84 = vmatmul.bf16.gmra.mxu0 %v60
  %v85 = vpop.f32.mrf.mxu0
  %v86 = vadd.f32 %v41, %v85
  %v87 = vpop.f32.mrf.mxu0
  %v88 = vadd.f32 %v41, %v87
  %89 = vmatmul.bf16.gmra.mxu0 %v63
  %v90 = vpop.f32.mrf.mxu0
  %v91 = vadd.f32 %v41, %v90
  %v92 = vpop.f32.mrf.mxu0
  %v93 = vadd.f32 %v41, %v92
  %94 = vmatmul.bf16.gmra.mxu0 %v66
  %v95 = vpop.f32.mrf.mxu0
  %v96 = vadd.f32 %v41, %v95
  %v97 = vpop.f32.mrf.mxu0
  %v98 = vadd.f32 %v41, %v97
  %99 = vmatmul.bf16.gmra.mxu0 %v69
  %v100 = vpop.f32.mrf.mxu0
  %v101 = vadd.f32 %v41, %v100
  %v102 = vpop.f32.mrf.mxu0
  %103 = vdwg.mxu0
  %v104 = vmax.f32 %v81, 0.0
  %v105 = vmax.f32 %v83, 0.0
  %v106 = vmax.f32 %v86, 0.0
  %v107 = vmax.f32 %v88, 0.0
  %v108 = vmax.f32 %v91, 0.0
  %v109 = vmax.f32 %v93, 0.0
  %v110 = vmax.f32 %v96, 0.0
  %v111 = vmax.f32 %v98, 0.0
  %v112 = vmax.f32 %v101, 0.0
  %v113 = vpack.c.bf16 %v105, %v104
  %v114 = vpack.c.bf16 %v107, %v106
  %v115 = vpack.c.bf16 %v109, %v108
  %v116 = vpack.c.bf16 %v111, %v110
  %v117 = vpack.c.bf16 %v112, %v112
  %v118 = vld [vmem:[%s3] sm:$0xf]
  %v119 = vld [vmem:[%s3 + $0x4] sm:$0xf]
  %v120 = vld [vmem:[%s3 + $0x8] sm:$0xf]
  %v121 = vld [vmem:[%s3 + $0xc] sm:$0xf]
  %v122 = vld [vmem:[%s3 + $0x10] sm:$0xf]
  %v123 = vld [vmem:[%s3 + $0x14] sm:$0xf]
  %v124 = vld [vmem:[%s3 + $0x18] sm:$0xf]
  %v125 = vld [vmem:[%s3 + $0x1c] sm:$0xf]
  %v126 = vld [vmem:[%s4] sm:$0x1]
  %v128 = vperm.slane %v126, 0
  %v138 = vunpack.c.l.b16 %v118
  %v139 = vunpack.c.l.b16 %v119
  %v140 = vunpack.c.l.b16 %v120
  %v141 = vunpack.c.l.b16 %v121
  %v142 = vunpack.c.l.b16 %v122
  %v143 = vunpack.c.l.b16 %v123
  %v144 = vunpack.c.l.b16 %v124
  %v145 = vunpack.c.l.b16 %v125
  %v146 = vpack.c.b16 %v139, %v138
  %v147 = vpack.c.b16 %v141, %v140
  %v148 = vpack.c.b16 %v143, %v142
  %v149 = vpack.c.b16 %v145, %v144
  %vm154 = vcmask 523264
  %v156 = vsel %vm154, %v113, 0
  %v159 = vsel %vm154, %v114, 0
  %v162 = vsel %vm154, %v115, 0
  %v165 = vsel %vm154, %v116, 0
  %v168 = vsel %vm154, %v117, 0
  %170 = vmatpush.bf16.msra.mxu0 0
  %171 = vmatpush.bf16.msra.mxu0 0
  %172 = vmatpush.bf16.msra.mxu0 0
  %173 = vmatpush.bf16.msra.mxu0 0
  %174 = vmatpush.bf16.msra.mxu0 %v149
  %175 = vmatpush.bf16.msra.mxu0 %v148
  %176 = vmatpush.bf16.msra.mxu0 %v147
  %177 = vmatpush.bf16.msra.mxu0 %v146
  %178 = vmatmul.bf16.gmra.mxu0 %v156
  %v179 = vpop.f32.mrf.mxu0
  %v180 = vadd.f32 %v128, %v179
  %v181 = vpop.f32.mrf.mxu0
  %v182 = vadd.f32 %v128, %v181
  %183 = vmatmul.bf16.gmra.mxu0 %v159
  %v184 = vpop.f32.mrf.mxu0
  %v185 = vadd.f32 %v128, %v184
  %v186 = vpop.f32.mrf.mxu0
  %v187 = vadd.f32 %v128, %v186
  %188 = vmatmul.bf16.gmra.mxu0 %v162
  %v189 = vpop.f32.mrf.mxu0
  %v190 = vadd.f32 %v128, %v189
  %v191 = vpop.f32.mrf.mxu0
  %v192 = vadd.f32 %v128, %v191
  %193 = vmatmul.bf16.gmra.mxu0 %v165
  %v194 = vpop.f32.mrf.mxu0
  %v195 = vadd.f32 %v128, %v194
  %v196 = vpop.f32.mrf.mxu0
  %v197 = vadd.f32 %v128, %v196
  %198 = vmatmul.bf16.gmra.mxu0 %v168
  %v199 = vpop.f32.mrf.mxu0
  %v200 = vadd.f32 %v128, %v199
  %v201 = vpop.f32.mrf.mxu0
  %202 = vdwg.mxu0
  %vm203 = vcmask 130048
  %204 = vst.msk [vmem:[%s5] sm:$0xff] %vm203, %v180
  %205 = vst.msk [vmem:[%s5 + $0x8] sm:$0xff] %vm203, %v182
  %206 = vst.msk [vmem:[%s5 + $0x10] sm:$0xff] %vm203, %v185
  %207 = vst.msk [vmem:[%s5 + $0x18] sm:$0xff] %vm203, %v187
  %208 = vst.msk [vmem:[%s5 + $0x20] sm:$0xff] %vm203, %v190
  %209 = vst.msk [vmem:[%s5 + $0x28] sm:$0xff] %vm203, %v192
  %210 = vst.msk [vmem:[%s5 + $0x30] sm:$0xff] %vm203, %v195
  %211 = vst.msk [vmem:[%s5 + $0x38] sm:$0xff] %vm203, %v197
  %212 = vst.msk [vmem:[%s5 + $0x40] sm:$0xff] %vm203, %v200
  // Predicated region
  $region22: #{tpu_custom_call.1} parent=0 // pred_check
    _
  $region23: #{tpu_custom_call.1} parent=0 // pred_check_branch
    %214 = sbr.rel (0) target = $region25
  $region24: #{tpu_custom_call.1} parent=0 // pred_region
    _
  $region25: #{tpu_custom_call.1} parent=0 // pred_fallthru
    _
  // Predicated region
  $region26: #{tpu_custom_call.1} parent=0 // pred_check
    _
  $region27: #{tpu_custom_call.1} parent=0 // pred_check_branch
    %216 = sbr.rel (0) target = $region29
  $region28: #{tpu_custom_call.1} parent=0 // pred_region
    _
  $region29: #{tpu_custom_call.1} parent=0 // pred_fallthru
    _

</llo_original>
